<compile_context>
chip_gen: v7x
topology: tpu7x:2x2x1
jax: 0.10.0
libtpu: 0.0.40
codegen_flags: <defaults>
</compile_context>

<pallas_src>
import jax
import jax.numpy as jnp
from jax.experimental import pallas as pl
from jax.experimental.pallas import tpu as pltpu


def _residual_block_kernel(x_ref, bw1_ref, b1_ref, bw2_ref, b2_ref,
                           bws_ref, bs_ref, out_ref):
    # x_ref   : (H+2, W*Cin)   H-padded input rows, W/channels folded into lanes
    # bw1_ref : (3, W*Cin,  W*Cout)  banded conv1 weights (one matrix per row tap)
    # b1_ref  : (1, W*Cout)  f32
    # bw2_ref : (3, W*Cout, W*Cout)  banded conv2 weights
    # b2_ref  : (1, W*Cout)  f32
    # bws_ref : (W*Cin, W*Cout)      block-diagonal 1x1 shortcut weights
    # bs_ref  : (1, W*Cout)  f32
    # out_ref : (H, W*Cout)  f32, lane-dense
    H, WCout = out_ref.shape
    f32 = jnp.float32

    x_top = x_ref[0:H, :]
    x_mid = x_ref[1:H + 1, :]
    x_bot = x_ref[2:H + 2, :]

    # ---- conv1 (3x3, stride 1, pad 1): 3 lane-dense MXU matmuls ----
    acc1 = jnp.dot(x_top, bw1_ref[0], preferred_element_type=f32)
    acc1 = acc1 + jnp.dot(x_mid, bw1_ref[1], preferred_element_type=f32)
    acc1 = acc1 + jnp.dot(x_bot, bw1_ref[2], preferred_element_type=f32)
    h1 = jnp.maximum(acc1 + b1_ref[...], 0.0)               # (H, W*Cout) f32

    # H-halo for conv2 built as a value: one concatenate, no scratch zeroing,
    # no strided masked stores (W-padding is already inside the banded weights).
    h1c = h1.astype(x_ref.dtype)
    zrow = jnp.zeros((1, WCout), dtype=h1c.dtype)
    mid = jnp.concatenate([zrow, h1c, zrow], axis=0)         # (H+2, W*Cout)

    # ---- conv2 (3x3, stride 1, pad 1) ----
    acc2 = jnp.dot(mid[0:H], bw2_ref[0], preferred_element_type=f32)
    acc2 = acc2 + jnp.dot(mid[1:H + 1], bw2_ref[1], preferred_element_type=f32)
    acc2 = acc2 + jnp.dot(mid[2:H + 2], bw2_ref[2], preferred_element_type=f32)
    acc2 = acc2 + b2_ref[...]

    # ---- 1x1 shortcut (identity handled via eye() weights in the wrapper) ----
    sc = jnp.dot(x_mid, bws_ref[...], preferred_element_type=f32) + bs_ref[...]

    # ---- residual add + final ReLU (f32 tail), dense 128-lane store ----
    out_ref[...] = jnp.maximum(acc2 + sc, 0.0).astype(out_ref.dtype)


def _banded_conv_weights(w_hwio, W):
    """Fold the kernel-width taps + zero padding of a 3x3 conv into banded
    matrices: returns (3, W*Cin, W*Cout), one matrix per kernel-row tap."""
    kh, kw, Ci, Co = w_hwio.shape
    mats = []
    for dy in range(kh):
        m = jnp.zeros((W * Ci, W * Co), dtype=w_hwio.dtype)
        for dx in range(kw):
            # source column block w_src = w + dx - 1  ->  shifted block diagonal
            shift = jnp.eye(W, W, k=1 - dx, dtype=w_hwio.dtype)
            m = m + jnp.kron(shift, w_hwio[dy, dx])
        mats.append(m)
    return jnp.stack(mats)


def residual_block(x_nchw, w1, b1, w2, b2, ws=None, bs=None, *,
                   compute_dtype=jnp.float32):
    """x_nchw: (N, Cin, H, W) f32.  w1: (3,3,Cin,Cout), w2: (3,3,Cout,Cout),
    ws: (Cin, Cout) or None for the identity shortcut (Cin == Cout).
    Returns (N, Cout, H, W) f32."""
    N, Cin, H, W = x_nchw.shape
    Cout = w1.shape[3]
    WCin, WCout = W * Cin, W * Cout

    if ws is None:
        assert Cin == Cout, "identity shortcut requires Cin == Cout"
        ws = jnp.eye(Cin, dtype=w1.dtype)
        bs = jnp.zeros((Cout,), dtype=w1.dtype)

    # NCHW -> (N, H, W*Cin) lane-dense rows; pad only H (W padding lives in the
    # banded weights).  Matmul operands in compute_dtype (bf16 on v6e/v7x),
    # biases / accumulation / elementwise tail stay f32.
    x_rows = jnp.transpose(x_nchw, (0, 2, 3, 1)).reshape(N, H, WCin)
    x_hpad = jnp.pad(x_rows, ((0, 0), (1, 1), (0, 0))).astype(compute_dtype)

    bw1 = _banded_conv_weights(w1, W).astype(compute_dtype)   # (3, W*Cin,  W*Cout)
    bw2 = _banded_conv_weights(w2, W).astype(compute_dtype)   # (3, W*Cout, W*Cout)
    bws = jnp.kron(jnp.eye(W, dtype=ws.dtype), ws).astype(compute_dtype)
    b1_l = jnp.tile(b1, W).reshape(1, WCout).astype(jnp.float32)
    b2_l = jnp.tile(b2, W).reshape(1, WCout).astype(jnp.float32)
    bs_l = jnp.tile(bs, W).reshape(1, WCout).astype(jnp.float32)

    out_rows = pl.pallas_call(
        _residual_block_kernel,
        out_shape=jax.ShapeDtypeStruct((N, H, WCout), jnp.float32),
        grid_spec=pltpu.PrefetchScalarGridSpec(
            num_scalar_prefetch=0,
            grid=(N,),
            in_specs=[
                pl.BlockSpec((None, H + 2, WCin), lambda n: (n, 0, 0)),
                pl.BlockSpec((3, WCin, WCout), lambda n: (0, 0, 0)),
                pl.BlockSpec((1, WCout), lambda n: (0, 0)),
                pl.BlockSpec((3, WCout, WCout), lambda n: (0, 0, 0)),
                pl.BlockSpec((1, WCout), lambda n: (0, 0)),
                pl.BlockSpec((WCin, WCout), lambda n: (0, 0)),
                pl.BlockSpec((1, WCout), lambda n: (0, 0)),
            ],
            out_specs=pl.BlockSpec((None, H, WCout), lambda n: (n, 0, 0)),
        ),
        compiler_params=pltpu.CompilerParams(
            dimension_semantics=("parallel",),
            # Live VMEM here is well under 1 MiB (all blocks + weights); the
            # explicit limit just documents the budget vs v7x's 64 MiB VMEM.
            vmem_limit_bytes=16 * 1024 * 1024,
        ),
    )(x_hpad, bw1, b1_l, bw2, b2_l, bws, bs_l)

    out_nhwc = out_rows.reshape(N, H, W, Cout)
    return jnp.transpose(out_nhwc, (0, 3, 1, 2))  # back to NCHW


def _reference(x_nchw, w1, b1, w2, b2, ws=None, bs=None):
    """Pure-JAX reference (lax conv) matching the PyTorch forward."""
    dn = jax.lax.conv_dimension_numbers(x_nchw.shape, (1, 1, 3, 3),
                                        ("NCHW", "OIHW", "NCHW"))

    def conv(x, w_hwio, b, pad):
        w_oihw = jnp.transpose(w_hwio, (3, 2, 0, 1))
        y = jax.lax.conv_general_dilated(x, w_oihw, (1, 1),
                                         [(pad, pad), (pad, pad)],
                                         dimension_numbers=dn)
        return y + b.reshape(1, -1, 1, 1)

    h = jnp.maximum(conv(x_nchw, w1, b1, 1), 0.0)
    h = conv(h, w2, b2, 1)
    if ws is None:
        sc = x_nchw
    else:
        sc = conv(x_nchw, ws.reshape(1, 1, *ws.shape), bs, 0)
    return jnp.maximum(h + sc, 0.0)


if __name__ == "__main__":
    key = jax.random.PRNGKey(0)
    N, Cin, Cout, H, W = 2, 4, 8, 16, 16

    k = jax.random.split(key, 12)
    x = jax.random.normal(k[0], (N, Cin, H, W), dtype=jnp.float32)
    w1 = jax.random.normal(k[1], (3, 3, Cin, Cout), dtype=jnp.float32) * 0.1
    b1 = jax.random.normal(k[2], (Cout,), dtype=jnp.float32) * 0.1
    w2 = jax.random.normal(k[3], (3, 3, Cout, Cout), dtype=jnp.float32) * 0.1
    b2 = jax.random.normal(k[4], (Cout,), dtype=jnp.float32) * 0.1
    ws = jax.random.normal(k[5], (Cin, Cout), dtype=jnp.float32) * 0.1
    bs = jax.random.normal(k[6], (Cout,), dtype=jnp.float32) * 0.1

    # Projection-shortcut path (Cin != Cout), f32 compute.
    out = jax.block_until_ready(residual_block(x, w1, b1, w2, b2, ws, bs))
    ref = _reference(x, w1, b1, w2, b2, ws, bs)
    assert out.shape == (N, Cout, H, W)
    assert jnp.allclose(out, ref, atol=1e-3, rtol=1e-3), "f32 mismatch vs reference"

    # bf16 compute path (v6e/v7x MXU), f32 accumulation / elementwise tail.
    out_bf16 = jax.block_until_ready(
        residual_block(x, w1, b1, w2, b2, ws, bs, compute_dtype=jnp.bfloat16))
    assert float(jnp.max(jnp.abs(out_bf16 - ref))) < 1.5e-1, "bf16 mismatch vs reference"

    # Identity-shortcut path (Cin == Cout), matching the PyTorch module branch.
    x_id = jax.random.normal(k[7], (N, Cout, H, W), dtype=jnp.float32)
    w1i = jax.random.normal(k[8], (3, 3, Cout, Cout), dtype=jnp.float32) * 0.1
    b1i = jax.random.normal(k[9], (Cout,), dtype=jnp.float32) * 0.1
    w2i = jax.random.normal(k[10], (3, 3, Cout, Cout), dtype=jnp.float32) * 0.1
    b2i = jax.random.normal(k[11], (Cout,), dtype=jnp.float32) * 0.1
    out_id = jax.block_until_ready(residual_block(x_id, w1i, b1i, w2i, b2i))
    ref_id = _reference(x_id, w1i, b1i, w2i, b2i)
    assert jnp.allclose(out_id, ref_id, atol=1e-3, rtol=1e-3), "identity-shortcut mismatch"

    print("KERNEL_OK")
</pallas_src>

<mosaic_0001>
module attributes {stable_mosaic.version = 11 : i64} {
  func.func @_residual_block_kernel(%arg0: i32, %arg1: memref<1x18x64xf32, #tpu.memory_space<vmem>>, %arg2: memref<3x64x128xf32, #tpu.memory_space<vmem>>, %arg3: memref<1x128xf32, #tpu.memory_space<vmem>>, %arg4: memref<3x128x128xf32, #tpu.memory_space<vmem>>, %arg5: memref<1x128xf32, #tpu.memory_space<vmem>>, %arg6: memref<64x128xf32, #tpu.memory_space<vmem>>, %arg7: memref<1x128xf32, #tpu.memory_space<vmem>>, %arg8: memref<1x16x128xf32, #tpu.memory_space<vmem>>) attributes {dimension_semantics = [#tpu.dimension_semantics<parallel>], iteration_bounds = array<i64: 2>, scalar_prefetch = 0 : i64, scratch_operands = 0 : i64, tpu.core_type = #tpu.core_type<tc>, window_params = [{transform_indices = @transform_0, window_bounds = array<i64: 1, 18, 64>}, {pipeline_mode = #tpu.pipeline_mode<synchronous>, transform_indices = @transform_1, window_bounds = array<i64: 3, 64, 128>}, {pipeline_mode = #tpu.pipeline_mode<synchronous>, transform_indices = @transform_2, window_bounds = array<i64: 1, 128>}, {pipeline_mode = #tpu.pipeline_mode<synchronous>, transform_indices = @transform_3, window_bounds = array<i64: 3, 128, 128>}, {pipeline_mode = #tpu.pipeline_mode<synchronous>, transform_indices = @transform_4, window_bounds = array<i64: 1, 128>}, {pipeline_mode = #tpu.pipeline_mode<synchronous>, transform_indices = @transform_5, window_bounds = array<i64: 64, 128>}, {pipeline_mode = #tpu.pipeline_mode<synchronous>, transform_indices = @transform_6, window_bounds = array<i64: 1, 128>}, {transform_indices = @transform_7, window_bounds = array<i64: 1, 16, 128>}]} {
    %c0 = arith.constant 0 : index
    %c0_0 = arith.constant 0 : index
    %c0_1 = arith.constant 0 : index
    %0 = vector.load %arg1[%c0, %c0_0, %c0_1] : memref<1x18x64xf32, #tpu.memory_space<vmem>>, vector<1x16x64xf32>
    %1 = vector.shape_cast %0 : vector<1x16x64xf32> to vector<16x64xf32>
    %c0_2 = arith.constant 0 : index
    %c1 = arith.constant 1 : index
    %c0_3 = arith.constant 0 : index
    %2 = vector.load %arg1[%c0_2, %c1, %c0_3] : memref<1x18x64xf32, #tpu.memory_space<vmem>>, vector<1x16x64xf32>
    %3 = vector.shape_cast %2 : vector<1x16x64xf32> to vector<16x64xf32>
    %c0_4 = arith.constant 0 : index
    %c2 = arith.constant 2 : index
    %c0_5 = arith.constant 0 : index
    %4 = vector.load %arg1[%c0_4, %c2, %c0_5] : memref<1x18x64xf32, #tpu.memory_space<vmem>>, vector<1x16x64xf32>
    %5 = vector.shape_cast %4 : vector<1x16x64xf32> to vector<16x64xf32>
    %c0_6 = arith.constant 0 : index
    %c0_7 = arith.constant 0 : index
    %c0_8 = arith.constant 0 : index
    %6 = vector.load %arg2[%c0_6, %c0_7, %c0_8] : memref<3x64x128xf32, #tpu.memory_space<vmem>>, vector<1x64x128xf32>
    %7 = vector.shape_cast %6 : vector<1x64x128xf32> to vector<64x128xf32>
    %cst = arith.constant dense<0.000000e+00> : vector<16x128xf32>
    %8 = tpu.matmul %1, %7, %cst {dimension_numbers = #tpu.dot_dimension_numbers<[1], [0], [0], [1], [0, 0, 1, 1], [], []>} : vector<16x64xf32>, vector<64x128xf32>, vector<16x128xf32> -> vector<16x128xf32>
    %c1_9 = arith.constant 1 : index
    %c0_10 = arith.constant 0 : index
    %c0_11 = arith.constant 0 : index
    %9 = vector.load %arg2[%c1_9, %c0_10, %c0_11] : memref<3x64x128xf32, #tpu.memory_space<vmem>>, vector<1x64x128xf32>
    %10 = vector.shape_cast %9 : vector<1x64x128xf32> to vector<64x128xf32>
    %cst_12 = arith.constant dense<0.000000e+00> : vector<16x128xf32>
    %11 = tpu.matmul %3, %10, %cst_12 {dimension_numbers = #tpu.dot_dimension_numbers<[1], [0], [0], [1], [0, 0, 1, 1], [], []>} : vector<16x64xf32>, vector<64x128xf32>, vector<16x128xf32> -> vector<16x128xf32>
    %12 = arith.addf %8, %11 : vector<16x128xf32>
    %c2_13 = arith.constant 2 : index
    %c0_14 = arith.constant 0 : index
    %c0_15 = arith.constant 0 : index
    %13 = vector.load %arg2[%c2_13, %c0_14, %c0_15] : memref<3x64x128xf32, #tpu.memory_space<vmem>>, vector<1x64x128xf32>
    %14 = vector.shape_cast %13 : vector<1x64x128xf32> to vector<64x128xf32>
    %cst_16 = arith.constant dense<0.000000e+00> : vector<16x128xf32>
    %15 = tpu.matmul %5, %14, %cst_16 {dimension_numbers = #tpu.dot_dimension_numbers<[1], [0], [0], [1], [0, 0, 1, 1], [], []>} : vector<16x64xf32>, vector<64x128xf32>, vector<16x128xf32> -> vector<16x128xf32>
    %16 = arith.addf %12, %15 : vector<16x128xf32>
    %c0_17 = arith.constant 0 : index
    %c0_18 = arith.constant 0 : index
    %17 = vector.load %arg3[%c0_17, %c0_18] : memref<1x128xf32, #tpu.memory_space<vmem>>, vector<1x128xf32>
    %18 = vector.broadcast %17 : vector<1x128xf32> to vector<16x128xf32>
    %19 = arith.addf %16, %18 : vector<16x128xf32>
    %cst_19 = arith.constant 0.000000e+00 : f32
    %20 = vector.broadcast %cst_19 : f32 to vector<16x128xf32>
    %21 = arith.maximumf %19, %20 : vector<16x128xf32>
    %cst_20 = arith.constant 0.000000e+00 : f32
    %22 = vector.broadcast %cst_20 : f32 to vector<1x128xf32>
    %23 = tpu.concatenate %22, %21, %22 in 0 : vector<1x128xf32>, vector<16x128xf32>, vector<1x128xf32> -> vector<18x128xf32>
    %24 = vector.extract_strided_slice %23 {offsets = [0, 0], sizes = [16, 128], strides = [1, 1]} : vector<18x128xf32> to vector<16x128xf32>
    %c0_21 = arith.constant 0 : index
    %c0_22 = arith.constant 0 : index
    %c0_23 = arith.constant 0 : index
    %25 = vector.load %arg4[%c0_21, %c0_22, %c0_23] : memref<3x128x128xf32, #tpu.memory_space<vmem>>, vector<1x128x128xf32>
    %26 = vector.shape_cast %25 : vector<1x128x128xf32> to vector<128x128xf32>
    %cst_24 = arith.constant dense<0.000000e+00> : vector<16x128xf32>
    %27 = tpu.matmul %24, %26, %cst_24 {dimension_numbers = #tpu.dot_dimension_numbers<[1], [0], [0], [1], [0, 0, 1, 1], [], []>} : vector<16x128xf32>, vector<128x128xf32>, vector<16x128xf32> -> vector<16x128xf32>
    %28 = vector.extract_strided_slice %23 {offsets = [1, 0], sizes = [16, 128], strides = [1, 1]} : vector<18x128xf32> to vector<16x128xf32>
    %c1_25 = arith.constant 1 : index
    %c0_26 = arith.constant 0 : index
    %c0_27 = arith.constant 0 : index
    %29 = vector.load %arg4[%c1_25, %c0_26, %c0_27] : memref<3x128x128xf32, #tpu.memory_space<vmem>>, vector<1x128x128xf32>
    %30 = vector.shape_cast %29 : vector<1x128x128xf32> to vector<128x128xf32>
    %cst_28 = arith.constant dense<0.000000e+00> : vector<16x128xf32>
    %31 = tpu.matmul %28, %30, %cst_28 {dimension_numbers = #tpu.dot_dimension_numbers<[1], [0], [0], [1], [0, 0, 1, 1], [], []>} : vector<16x128xf32>, vector<128x128xf32>, vector<16x128xf32> -> vector<16x128xf32>
    %32 = arith.addf %27, %31 : vector<16x128xf32>
    %33 = vector.extract_strided_slice %23 {offsets = [2, 0], sizes = [16, 128], strides = [1, 1]} : vector<18x128xf32> to vector<16x128xf32>
    %c2_29 = arith.constant 2 : index
    %c0_30 = arith.constant 0 : index
    %c0_31 = arith.constant 0 : index
    %34 = vector.load %arg4[%c2_29, %c0_30, %c0_31] : memref<3x128x128xf32, #tpu.memory_space<vmem>>, vector<1x128x128xf32>
    %35 = vector.shape_cast %34 : vector<1x128x128xf32> to vector<128x128xf32>
    %cst_32 = arith.constant dense<0.000000e+00> : vector<16x128xf32>
    %36 = tpu.matmul %33, %35, %cst_32 {dimension_numbers = #tpu.dot_dimension_numbers<[1], [0], [0], [1], [0, 0, 1, 1], [], []>} : vector<16x128xf32>, vector<128x128xf32>, vector<16x128xf32> -> vector<16x128xf32>
    %37 = arith.addf %32, %36 : vector<16x128xf32>
    %c0_33 = arith.constant 0 : index
    %c0_34 = arith.constant 0 : index
    %38 = vector.load %arg5[%c0_33, %c0_34] : memref<1x128xf32, #tpu.memory_space<vmem>>, vector<1x128xf32>
    %39 = vector.broadcast %38 : vector<1x128xf32> to vector<16x128xf32>
    %40 = arith.addf %37, %39 : vector<16x128xf32>
    %c0_35 = arith.constant 0 : index
    %c0_36 = arith.constant 0 : index
    %41 = vector.load %arg6[%c0_35, %c0_36] : memref<64x128xf32, #tpu.memory_space<vmem>>, vector<64x128xf32>
    %cst_37 = arith.constant dense<0.000000e+00> : vector<16x128xf32>
    %42 = tpu.matmul %3, %41, %cst_37 {dimension_numbers = #tpu.dot_dimension_numbers<[1], [0], [0], [1], [0, 0, 1, 1], [], []>} : vector<16x64xf32>, vector<64x128xf32>, vector<16x128xf32> -> vector<16x128xf32>
    %c0_38 = arith.constant 0 : index
    %c0_39 = arith.constant 0 : index
    %43 = vector.load %arg7[%c0_38, %c0_39] : memref<1x128xf32, #tpu.memory_space<vmem>>, vector<1x128xf32>
    %44 = vector.broadcast %43 : vector<1x128xf32> to vector<16x128xf32>
    %45 = arith.addf %42, %44 : vector<16x128xf32>
    %46 = arith.addf %40, %45 : vector<16x128xf32>
    %cst_40 = arith.constant 0.000000e+00 : f32
    %47 = vector.broadcast %cst_40 : f32 to vector<16x128xf32>
    %48 = arith.maximumf %46, %47 : vector<16x128xf32>
    %c0_41 = arith.constant 0 : index
    %c0_42 = arith.constant 0 : index
    %c0_43 = arith.constant 0 : index
    %49 = vector.load %arg8[%c0_41, %c0_42, %c0_43] : memref<1x16x128xf32, #tpu.memory_space<vmem>>, vector<1x16x128xf32>
    %50 = vector.shape_cast %49 : vector<1x16x128xf32> to vector<16x128xf32>
    %51 = vector.shape_cast %48 : vector<16x128xf32> to vector<1x16x128xf32>
    tpu.vector_store %arg8[%c0_41, %c0_42, %c0_43], %51 {strides = array<i32>} : memref<1x16x128xf32, #tpu.memory_space<vmem>>, vector<1x16x128xf32>,
    return
  }
  func.func @transform_0(%arg0: i32) -> (i32, i32, i32) {
    %c0_i32 = arith.constant 0 : i32
    %c0_i32_0 = arith.constant 0 : i32
    %c0_i32_1 = arith.constant 0 : i32
    return %arg0, %c0_i32, %c0_i32_0 : i32, i32, i32
  }
  func.func @transform_1(%arg0: i32) -> (i32, i32, i32) {
    %c0_i32 = arith.constant 0 : i32
    %c0_i32_0 = arith.constant 0 : i32
    %c0_i32_1 = arith.constant 0 : i32
    %c0_i32_2 = arith.constant 0 : i32
    return %c0_i32, %c0_i32_0, %c0_i32_1 : i32, i32, i32
  }
  func.func @transform_2(%arg0: i32) -> (i32, i32) {
    %c0_i32 = arith.constant 0 : i32
    %c0_i32_0 = arith.constant 0 : i32
    %c0_i32_1 = arith.constant 0 : i32
    return %c0_i32, %c0_i32_0 : i32, i32
  }
  func.func @transform_3(%arg0: i32) -> (i32, i32, i32) {
    %c0_i32 = arith.constant 0 : i32
    %c0_i32_0 = arith.constant 0 : i32
    %c0_i32_1 = arith.constant 0 : i32
    %c0_i32_2 = arith.constant 0 : i32
    return %c0_i32, %c0_i32_0, %c0_i32_1 : i32, i32, i32
  }
  func.func @transform_4(%arg0: i32) -> (i32, i32) {
    %c0_i32 = arith.constant 0 : i32
    %c0_i32_0 = arith.constant 0 : i32
    %c0_i32_1 = arith.constant 0 : i32
    return %c0_i32, %c0_i32_0 : i32, i32
  }
  func.func @transform_5(%arg0: i32) -> (i32, i32) {
    %c0_i32 = arith.constant 0 : i32
    %c0_i32_0 = arith.constant 0 : i32
    %c0_i32_1 = arith.constant 0 : i32
    return %c0_i32, %c0_i32_0 : i32, i32
  }
  func.func @transform_6(%arg0: i32) -> (i32, i32) {
    %c0_i32 = arith.constant 0 : i32
    %c0_i32_0 = arith.constant 0 : i32
    %c0_i32_1 = arith.constant 0 : i32
    return %c0_i32, %c0_i32_0 : i32, i32
  }
  func.func @transform_7(%arg0: i32) -> (i32, i32, i32) {
    %c0_i32 = arith.constant 0 : i32
    %c0_i32_0 = arith.constant 0 : i32
    %c0_i32_1 = arith.constant 0 : i32
    return %arg0, %c0_i32, %c0_i32_0 : i32, i32, i32
  }
}

</mosaic_0001>

<llo_original>
// kernel: tpu_custom_call.1
$region0: #{tpu_custom_call.1}
  #allocation0 [shape = 'u32[]', space=smem, size = 0x4, offset = 0x4, fixed_abs, tag = 'smem constant byte address 0x4 - core index']
  #allocation1 [shape = 'u32[144,128]{1,0:T(1,128)}', space=vmem, size = 0x12000, scoped, tag = 'internal scratch']
  %s0 = inlined_call_operand.vmem [shape: f32[2,18,64], index: 0, kind: input, shape index: {}]
  %s1 = inlined_call_operand.hbm [shape: f32[3,64,128], index: 1, kind: input, shape index: {}]
  %s2 = inlined_call_operand.vmem [shape: f32[1,128], index: 2, kind: input, shape index: {}]
  %s3 = inlined_call_operand.hbm [shape: f32[3,128,128], index: 3, kind: input, shape index: {}]
  %s4 = inlined_call_operand.vmem [shape: f32[1,128], index: 4, kind: input, shape index: {}]
  %s5 = inlined_call_operand.vmem [shape: f32[64,128], index: 5, kind: input, shape index: {}]
  %s6 = inlined_call_operand.vmem [shape: f32[1,128], index: 6, kind: input, shape index: {}]
  %s7 = inlined_call_operand.hbm [shape: f32[2,16,128], index: 7, kind: output, shape index: {}]
  %s8 = sld [smem:[#allocation0]]
  $region69: #{tpu_custom_call.1} parent=0
    _
  %s10 = ssub.s32 1, %s8
  %s11 = scalar_select 0, %s10, %s8
  $region1: #{tpu_custom_call.1} parent=0
    #allocation2 [shape = 'u8[98304]{0}', space=vmem, size = 0x18000, scoped, tag = 'input window, operand 1, single buffered']
    #allocation3 [shape = 's32[2]{0}', space=sflag, size = 0x8, scoped, tag = 'scoped memory for tpu_custom_call.1']
    #allocation4 [shape = 's32[2]{0}', space=sflag, size = 0x8, scoped, tag = 'scoped memory for tpu_custom_call.1']
    #allocation5 [shape = 'u8[196608]{0}', space=vmem, size = 0x30000, scoped, tag = 'input window, operand 3, single buffered']
    #allocation6 [shape = 's32[1]{0}', space=sflag, size = 0x4, scoped, tag = 'scoped memory for tpu_custom_call.1']
    #allocation7 [shape = 'u8[16384]{0}', space=vmem, size = 0x4000, scoped, tag = 'output window, operand 0']
    %12 = vsyncpa [#allocation3], 0
    %13 = vsyncpa [#allocation6], 0
    %14 = vsyncpa [#allocation4], 0
    %s15 = scalar_lea.sflag [#allocation4], 1
    %16 = vsyncpa %s15, 0
    loop: start=0, step=1, limit=4
    $region2: #{tpu_custom_call.1} parent=1 // loop_pre_header
      _
    $region3: #{tpu_custom_call.1} parent=1 // loop_header
      %s18 = sphi 0, %s22
      %p19 = scmp.ge.s32.totalorder %s18, 4
      %s28 = sphi 0, %s30
      %s31 = sphi 0, %s28
      %s32 = sphi 0, %s31
      %s48 = sphi 0, %s32
      %s52 = sphi 0, %s52
      %s54 = sphi 0, %s52
      %s55 = sphi 0, %s54
      %s69 = sphi 0, %s55
      %s73 = sphi 0, %s73
      %s75 = sphi 0, %s73
      %s76 = sphi 0, %s75
      %s90 = sphi 0, %s76
      %s94 = sphi 0, %s94
      %s96 = sphi 0, %s94
      %s97 = sphi 0, %s96
      %s111 = sphi 0, %s97
      %s115 = sphi 0, %s115
      %s117 = sphi 0, %s115
      %s118 = sphi 0, %s117
      %s132 = sphi 0, %s118
      %s136 = sphi 0, %s136
      %s138 = sphi 0, %s136
      %s139 = sphi 0, %s138
      %s153 = sphi 0, %s139
      %s157 = sphi 0, %s157
      %s159 = sphi 0, %s157
      %s160 = sphi 0, %s159
      %s174 = sphi 0, %s160
      %s180 = sphi 0, %s182
      %s183 = sphi 0, %s180
      %s184 = sphi 0, %s183
      %s200 = sphi 0, %s184
    $region4: #{tpu_custom_call.1} parent=1 // loop_header_branch
      %21 = sbr.rel (%p19) target = $region8
    $region5: #{tpu_custom_call.1} parent=1 // loop_body
      %s23 = ssub.s32 %s18, 1
      %s24 = ssub.s32 %s18, 2
      %s25 = sadd.s32 %s18, 1
      %s26 = ssub.s32 %s18, %s25
      %p27 = scmp.eq.s32.totalorder %s26, 0
      %s29 = sadd.s32 %s28, 1
      %s30 = scalar_select %p27, %s28, %s29
      %p33 = pneg %p27
      %p34 = scmp.eq.s32.totalorder %s18, 1
      %p35 = por %p33, %p34
      %p36 = scmp.ne.s32.totalorder %s28, %s31
      %p37 = scmp.eq.s32.totalorder %s18, 0
      %p38 = por %p36, %p37
      %p39 = scmp.ne.s32.totalorder %s28, %s31
      %p40 = scmp.eq.s32.totalorder %s23, 1
      %p41 = por %p39, %p40
      %p42 = scmp.ne.s32.totalorder %s31, %s32
      %p43 = scmp.eq.s32.totalorder %s23, 0
      %p44 = por %p42, %p43
      %p45 = scmp.ne.s32.totalorder %s31, %s32
      %p46 = scmp.eq.s32.totalorder %s24, 1
      %p47 = por %p45, %p46
      %p49 = scmp.ne.s32.totalorder %s32, %s48
      %p50 = scmp.eq.s32.totalorder %s24, 0
      %p51 = por %p49, %p50
      %s53 = sadd.s32 %s52, 1
      %p56 = scmp.eq.s32.totalorder %s18, 1
      %p57 = scmp.ne.s32.totalorder %s52, %s54
      %p58 = scmp.eq.s32.totalorder %s18, 0
      %p59 = por %p57, %p58
      %p60 = scmp.ne.s32.totalorder %s52, %s54
      %p61 = scmp.eq.s32.totalorder %s23, 1
      %p62 = por %p60, %p61
      %p63 = scmp.ne.s32.totalorder %s54, %s55
      %p64 = scmp.eq.s32.totalorder %s23, 0
      %p65 = por %p63, %p64
      %p66 = scmp.ne.s32.totalorder %s54, %s55
      %p67 = scmp.eq.s32.totalorder %s24, 1
      %p68 = por %p66, %p67
      %p70 = scmp.ne.s32.totalorder %s55, %s69
      %p71 = scmp.eq.s32.totalorder %s24, 0
      %p72 = por %p70, %p71
      %s74 = sadd.s32 %s73, 1
      %p77 = scmp.eq.s32.totalorder %s18, 1
      %p78 = scmp.ne.s32.totalorder %s73, %s75
      %p79 = scmp.eq.s32.totalorder %s18, 0
      %p80 = por %p78, %p79
      %p81 = scmp.ne.s32.totalorder %s73, %s75
      %p82 = scmp.eq.s32.totalorder %s23, 1
      %p83 = por %p81, %p82
      %p84 = scmp.ne.s32.totalorder %s75, %s76
      %p85 = scmp.eq.s32.totalorder %s23, 0
      %p86 = por %p84, %p85
      %p87 = scmp.ne.s32.totalorder %s75, %s76
      %p88 = scmp.eq.s32.totalorder %s24, 1
      %p89 = por %p87, %p88
      %p91 = scmp.ne.s32.totalorder %s76, %s90
      %p92 = scmp.eq.s32.totalorder %s24, 0
      %p93 = por %p91, %p92
      %s95 = sadd.s32 %s94, 1
      %p98 = scmp.eq.s32.totalorder %s18, 1
      %p99 = scmp.ne.s32.totalorder %s94, %s96
      %p100 = scmp.eq.s32.totalorder %s18, 0
      %p101 = por %p99, %p100
      %p102 = scmp.ne.s32.totalorder %s94, %s96
      %p103 = scmp.eq.s32.totalorder %s23, 1
      %p104 = por %p102, %p103
      %p105 = scmp.ne.s32.totalorder %s96, %s97
      %p106 = scmp.eq.s32.totalorder %s23, 0
      %p107 = por %p105, %p106
      %p108 = scmp.ne.s32.totalorder %s96, %s97
      %p109 = scmp.eq.s32.totalorder %s24, 1
      %p110 = por %p108, %p109
      %p112 = scmp.ne.s32.totalorder %s97, %s111
      %p113 = scmp.eq.s32.totalorder %s24, 0
      %p114 = por %p112, %p113
      %s116 = sadd.s32 %s115, 1
      %p119 = scmp.eq.s32.totalorder %s18, 1
      %p120 = scmp.ne.s32.totalorder %s115, %s117
      %p121 = scmp.eq.s32.totalorder %s18, 0
      %p122 = por %p120, %p121
      %p123 = scmp.ne.s32.totalorder %s115, %s117
      %p124 = scmp.eq.s32.totalorder %s23, 1
      %p125 = por %p123, %p124
      %p126 = scmp.ne.s32.totalorder %s117, %s118
      %p127 = scmp.eq.s32.totalorder %s23, 0
      %p128 = por %p126, %p127
      %p129 = scmp.ne.s32.totalorder %s117, %s118
      %p130 = scmp.eq.s32.totalorder %s24, 1
      %p131 = por %p129, %p130
      %p133 = scmp.ne.s32.totalorder %s118, %s132
      %p134 = scmp.eq.s32.totalorder %s24, 0
      %p135 = por %p133, %p134
      %s137 = sadd.s32 %s136, 1
      %p140 = scmp.eq.s32.totalorder %s18, 1
      %p141 = scmp.ne.s32.totalorder %s136, %s138
      %p142 = scmp.eq.s32.totalorder %s18, 0
      %p143 = por %p141, %p142
      %p144 = scmp.ne.s32.totalorder %s136, %s138
      %p145 = scmp.eq.s32.totalorder %s23, 1
      %p146 = por %p144, %p145
      %p147 = scmp.ne.s32.totalorder %s138, %s139
      %p148 = scmp.eq.s32.totalorder %s23, 0
      %p149 = por %p147, %p148
      %p150 = scmp.ne.s32.totalorder %s138, %s139
      %p151 = scmp.eq.s32.totalorder %s24, 1
      %p152 = por %p150, %p151
      %p154 = scmp.ne.s32.totalorder %s139, %s153
      %p155 = scmp.eq.s32.totalorder %s24, 0
      %p156 = por %p154, %p155
      %s158 = sadd.s32 %s157, 1
      %p161 = scmp.eq.s32.totalorder %s18, 1
      %p162 = scmp.ne.s32.totalorder %s157, %s159
      %p163 = scmp.eq.s32.totalorder %s18, 0
      %p164 = por %p162, %p163
      %p165 = scmp.ne.s32.totalorder %s157, %s159
      %p166 = scmp.eq.s32.totalorder %s23, 1
      %p167 = por %p165, %p166
      %p168 = scmp.ne.s32.totalorder %s159, %s160
      %p169 = scmp.eq.s32.totalorder %s23, 0
      %p170 = por %p168, %p169
      %p171 = scmp.ne.s32.totalorder %s159, %s160
      %p172 = scmp.eq.s32.totalorder %s24, 1
      %p173 = por %p171, %p172
      %p175 = scmp.ne.s32.totalorder %s160, %s174
      %p176 = scmp.eq.s32.totalorder %s24, 0
      %p177 = por %p175, %p176
      %s178 = ssub.s32 %s18, %s25
      %p179 = scmp.eq.s32.totalorder %s178, 0
      %s181 = sadd.s32 %s180, 1
      %s182 = scalar_select %p179, %s180, %s181
      %p185 = pneg %p179
      %p186 = scmp.eq.s32.totalorder %s18, 1
      %p187 = por %p185, %p186
      %p188 = scmp.ne.s32.totalorder %s180, %s183
      %p189 = scmp.eq.s32.totalorder %s18, 0
      %p190 = por %p188, %p189
      %p191 = scmp.ne.s32.totalorder %s180, %s183
      %p192 = scmp.eq.s32.totalorder %s23, 1
      %p193 = por %p191, %p192
      %p194 = scmp.ne.s32.totalorder %s183, %s184
      %p195 = scmp.eq.s32.totalorder %s23, 0
      %p196 = por %p194, %p195
      %p197 = scmp.ne.s32.totalorder %s183, %s184
      %p198 = scmp.eq.s32.totalorder %s24, 1
      %p199 = por %p197, %p198
      %p201 = scmp.ne.s32.totalorder %s184, %s200
      %p202 = scmp.eq.s32.totalorder %s24, 0
      %p203 = por %p201, %p202
      %p204 = scmp.le.s32.totalorder 1, %s18
      %p205 = scmp.lt.s32.totalorder %s18, 3
      %p206 = pnand %p204, %p205
      %p207 = pneg %p206
      // Predicated region
      $region9: #{tpu_custom_call.1} parent=5 // pred_check
        _
      $region10: #{tpu_custom_call.1} parent=5 // pred_check_branch
        %209 = sbr.rel (%p206) target = $region12
      $region11: #{tpu_custom_call.1} parent=5 // pred_region
        %s210 = ssub.s32 %s18, 1
        // Predicated region
        $region13: #{tpu_custom_call.1} parent=11 // pred_check
          %p211 = pneg %p65
        $region14: #{tpu_custom_call.1} parent=11 // pred_check_branch
          %213 = sbr.rel (%p211) target = $region16
        $region15: #{tpu_custom_call.1} parent=11 // pred_region
          %s215 = ssub.s32 3072, 3072
          %216 = vsyncadd [#allocation3], %s215
          %s217 = sshll.u32 [#allocation2], 4
          %s218 = int_to_ptr.vmem [resolvable:$true] %s217
          %223 = dma.hbm_to_vmem [thread:$0]  %s1, 3072, %s218, [#allocation3], 128, 128, 8
        $region16: #{tpu_custom_call.1} parent=11 // pred_fallthru
          _
        // Predicated region
        $region17: #{tpu_custom_call.1} parent=11 // pred_check
          %p224 = pneg %p86
        $region18: #{tpu_custom_call.1} parent=11 // pred_check_branch
          %226 = sbr.rel (%p224) target = $region20
        $region19: #{tpu_custom_call.1} parent=11 // pred_region
          _
        $region20: #{tpu_custom_call.1} parent=11 // pred_fallthru
          _
        // Predicated region
        $region21: #{tpu_custom_call.1} parent=11 // pred_check
          %p227 = pneg %p107
        $region22: #{tpu_custom_call.1} parent=11 // pred_check_branch
          %229 = sbr.rel (%p227) target = $region24
        $region23: #{tpu_custom_call.1} parent=11 // pred_region
          %s231 = ssub.s32 6144, 6144
          %232 = vsyncadd [#allocation6], %s231
          %s233 = sshll.u32 [#allocation5], 4
          %s234 = int_to_ptr.vmem [resolvable:$true] %s233
          %239 = dma.hbm_to_vmem [thread:$0]  %s3, 6144, %s234, [#allocation6], 128, 128, 8
        $region24: #{tpu_custom_call.1} parent=11 // pred_fallthru
          _
        // Predicated region
        $region25: #{tpu_custom_call.1} parent=11 // pred_check
          %p240 = pneg %p128
        $region26: #{tpu_custom_call.1} parent=11 // pred_check_branch
          %242 = sbr.rel (%p240) target = $region28
        $region27: #{tpu_custom_call.1} parent=11 // pred_region
          _
        $region28: #{tpu_custom_call.1} parent=11 // pred_fallthru
          _
        // Predicated region
        $region29: #{tpu_custom_call.1} parent=11 // pred_check
          %p243 = pneg %p149
        $region30: #{tpu_custom_call.1} parent=11 // pred_check_branch
          %245 = sbr.rel (%p243) target = $region32
        $region31: #{tpu_custom_call.1} parent=11 // pred_region
          _
        $region32: #{tpu_custom_call.1} parent=11 // pred_fallthru
          _
        // Predicated region
        $region33: #{tpu_custom_call.1} parent=11 // pred_check
          %p246 = pneg %p170
        $region34: #{tpu_custom_call.1} parent=11 // pred_check_branch
          %248 = sbr.rel (%p246) target = $region36
        $region35: #{tpu_custom_call.1} parent=11 // pred_region
          _
        $region36: #{tpu_custom_call.1} parent=11 // pred_fallthru
          _
      $region12: #{tpu_custom_call.1} parent=5 // pred_fallthru
        _
      %p249 = scmp.lt.s32.totalorder %s18, 2
      // Predicated region
      $region37: #{tpu_custom_call.1} parent=5 // pred_check
        %p250 = pneg %p249
      $region38: #{tpu_custom_call.1} parent=5 // pred_check_branch
        %252 = sbr.rel (%p250) target = $region40
      $region39: #{tpu_custom_call.1} parent=5 // pred_region
        // Predicated region
        $region41: #{tpu_custom_call.1} parent=39 // pred_check
          %p253 = pneg %p38
        $region42: #{tpu_custom_call.1} parent=39 // pred_check_branch
          %255 = sbr.rel (%p253) target = $region44
        $region43: #{tpu_custom_call.1} parent=39 // pred_region
          %p256 = scmp.lt.s32.totalorder %s18, 1
          %s257 = scalar_select %p256, %s18, 1
          %s258 = smul.addr %s257, 3
          %s259 = smul.addr %s258, 8
          %s260 = scalar_lea.vmem %s0, %s259
        $region44: #{tpu_custom_call.1} parent=39 // pred_fallthru
          _
      $region40: #{tpu_custom_call.1} parent=5 // pred_fallthru
        _
      %p261 = scmp.le.s32.totalorder 1, %s18
      %p262 = scmp.lt.s32.totalorder %s18, 3
      %p263 = pnand %p261, %p262
      %p264 = pneg %p263
      // Predicated region
      $region45: #{tpu_custom_call.1} parent=5 // pred_check
        _
      $region46: #{tpu_custom_call.1} parent=5 // pred_check_branch
        %266 = sbr.rel (%p263) target = $region48
      $region47: #{tpu_custom_call.1} parent=5 // pred_region
        %s267 = ssub.s32 %s18, 1
        // Predicated region
        $region49: #{tpu_custom_call.1} parent=47 // pred_check
          %p268 = pneg %p65
        $region50: #{tpu_custom_call.1} parent=47 // pred_check_branch
          %270 = sbr.rel (%p268) target = $region52
        $region51: #{tpu_custom_call.1} parent=47 // pred_region
          %271 = dma.done [#allocation3], 3072
        $region52: #{tpu_custom_call.1} parent=47 // pred_fallthru
          _
        // Predicated region
        $region53: #{tpu_custom_call.1} parent=47 // pred_check
          %p272 = pneg %p107
        $region54: #{tpu_custom_call.1} parent=47 // pred_check_branch
          %274 = sbr.rel (%p272) target = $region56
        $region55: #{tpu_custom_call.1} parent=47 // pred_region
          %275 = dma.done [#allocation6], 6144
        $region56: #{tpu_custom_call.1} parent=47 // pred_fallthru
          _
        %p276 = scmp.lt.s32.totalorder %s23, 1
        %s277 = scalar_select %p276, %s23, 1
        %s278 = smul.addr %s277, 3
        %s279 = smul.addr %s278, 8
        %s280 = scalar_lea.vmem %s0, %s279
        %p281 = pneg %p44
        %p282 = pneg %p41
        %p283 = pneg %p65
        %p284 = pneg %p62
        %p285 = pneg %p86
        %p286 = pneg %p83
        %p287 = pneg %p107
        %p288 = pneg %p104
        %p289 = pneg %p128
        %p290 = pneg %p125
        %p291 = pneg %p149
        %p292 = pneg %p146
        %p293 = pneg %p170
        %p294 = pneg %p167
        %p295 = pneg %p196
        %p296 = pneg %p193
        %s297 = sand.u32 %s183, 1
        %s298 = scalar_lea.sflag [#allocation4], %s297
        %s299 = sand.u32 %s183, 1
        %s300 = smul.addr %s299, 16
        %s301 = scalar_lea.vmem [#allocation7], %s300
        %p302 = scmp.lt.s32.totalorder %s23, 1
        %s303 = scalar_select %p302, %s23, 1
        %s304 = smul.addr %s303, 3
        %s305 = smul.addr %s304, 8
        %s306 = scalar_lea.vmem %s0, %s305
        %v307 = vld [vmem:[%s306] sm:$0xff]
        %v308 = vld [vmem:[%s306 + $0x8] sm:$0xff]
        %v309 = vld [vmem:[%s306 + $0x1] sm:$0xff]
        %v310 = vld [vmem:[%s306 + $0x9] sm:$0xff]
        %v311 = vld [vmem:[%s306 + $0x2] sm:$0xff]
        %v312 = vld [vmem:[%s306 + $0xa] sm:$0xff]
        %v313 = vld [vmem:[#allocation2] sm:$0xff]
        %v314 = vld [vmem:[#allocation2 + $0x8] sm:$0xff]
        %v315 = vld [vmem:[#allocation2 + $0x10] sm:$0xff]
        %v316 = vld [vmem:[#allocation2 + $0x18] sm:$0xff]
        %v317 = vld [vmem:[#allocation2 + $0x20] sm:$0xff]
        %v318 = vld [vmem:[#allocation2 + $0x28] sm:$0xff]
        %v319 = vld [vmem:[#allocation2 + $0x30] sm:$0xff]
        %v320 = vld [vmem:[#allocation2 + $0x38] sm:$0xff]
        %s321 = scalar_lea.vmem [#allocation2], 64
        %v322 = vld [vmem:[%s321] sm:$0xff]
        %v323 = vld [vmem:[%s321 + $0x8] sm:$0xff]
        %v324 = vld [vmem:[%s321 + $0x10] sm:$0xff]
        %v325 = vld [vmem:[%s321 + $0x18] sm:$0xff]
        %v326 = vld [vmem:[%s321 + $0x20] sm:$0xff]
        %v327 = vld [vmem:[%s321 + $0x28] sm:$0xff]
        %v328 = vld [vmem:[%s321 + $0x30] sm:$0xff]
        %v329 = vld [vmem:[%s321 + $0x38] sm:$0xff]
        %vm330 = vcmask 523264
        %v332 = vsel %vm330, %v309, 0
        %v335 = vsel %vm330, %v310, 0
        %337 = vmatprep.subr.mxu0 0.0
        %338 = vmatpush1.msra.mxu0 %v322
        %339 = vmatprep.subr.mxu0 0.0
        %340 = vmatpush1.msra.mxu0 %v323
        %341 = vmatprep.subr.mxu0 0.0
        %342 = vmatpush1.msra.mxu0 %v324
        %343 = vmatprep.subr.mxu0 0.0
        %344 = vmatpush1.msra.mxu0 %v325
        %345 = vmatprep.subr.mxu0 0.0
        %346 = vmatpush1.msra.mxu0 %v326
        %347 = vmatprep.subr.mxu0 0.0
        %348 = vmatpush1.msra.mxu0 %v327
        %349 = vmatprep.subr.mxu0 0.0
        %350 = vmatpush1.msra.mxu0 %v328
        %351 = vmatprep.subr.mxu0 0.0
        %352 = vmatpush1.msra.mxu0 %v329
        %353 = vmatprep.subr.mxu0 0.0
        %354 = vmatpush1.msra.mxu0 0.0
        %355 = vmatprep.subr.mxu0 0.0
        %356 = vmatpush1.msra.mxu0 0.0
        %357 = vmatprep.subr.mxu0 0.0
        %358 = vmatpush1.msra.mxu0 0.0
        %359 = vmatprep.subr.mxu0 0.0
        %360 = vmatpush1.msra.mxu0 0.0
        %361 = vmatprep.subr.mxu0 0.0
        %362 = vmatpush1.msra.mxu0 0.0
        %363 = vmatprep.subr.mxu0 0.0
        %364 = vmatpush1.msra.mxu0 0.0
        %365 = vmatprep.subr.mxu0 0.0
        %366 = vmatpush1.msra.mxu0 0.0
        %367 = vmatprep.subr.mxu0 0.0
        %368 = vmatpush1.msra.mxu0 0.0
        %369 = vmatprep.subr.mxu0 0.0
        %370 = vmatpush1.msra.mxu0 0.0
        %371 = vmatprep.subr.mxu0 0.0
        %372 = vmatpush1.msra.mxu0 0.0
        %373 = vmatprep.subr.mxu0 0.0
        %374 = vmatpush1.msra.mxu0 0.0
        %375 = vmatprep.subr.mxu0 0.0
        %376 = vmatpush1.msra.mxu0 0.0
        %377 = vmatprep.subr.mxu0 0.0
        %378 = vmatpush1.msra.mxu0 0.0
        %379 = vmatprep.subr.mxu0 0.0
        %380 = vmatpush1.msra.mxu0 0.0
        %381 = vmatprep.subr.mxu0 0.0
        %382 = vmatpush1.msra.mxu0 0.0
        %383 = vmatprep.subr.mxu0 0.0
        %384 = vmatpush1.msra.mxu0 0.0
        %385 = vmatprep.subr.mxu0 0.0
        %386 = vmatpush1.msra.mxu0 0.0
        %387 = vmatprep.subr.mxu0 0.0
        %388 = vmatpush1.msra.mxu0 0.0
        %389 = vmatprep.subr.mxu0 0.0
        %390 = vmatpush1.msra.mxu0 0.0
        %391 = vmatprep.subr.mxu0 0.0
        %392 = vmatpush1.msra.mxu0 0.0
        %393 = vmatprep.subr.mxu0 0.0
        %394 = vmatpush1.msra.mxu0 0.0
        %395 = vmatprep.subr.mxu0 0.0
        %396 = vmatpush1.msra.mxu0 0.0
        %397 = vmatprep.subr.mxu0 0.0
        %398 = vmatpush1.msra.mxu0 0.0
        %399 = vmatprep.subr.mxu0 0.0
        %400 = vmatpush1.msra.mxu0 0.0
        %401 = vmatprep.mubr.f32.mxu0 0.0
        %402 = vmatmul.mubr.f32.gmra.mrb[0].mxu0 %v332
        %v403 = vpop.f32.mrb[0].mxu0
        %v404 = vadd.f32 0.0, %v403
        %v405 = vpop.f32.mrb[0].mxu0
        %406 = vmatprep.mubr.f32.mxu0 0.0
        %407 = vmatmul.mubr.f32.gmra.mrb[0].mxu0 %v335
        %v408 = vpop.f32.mrb[0].mxu0
        %v409 = vadd.f32 0.0, %v408
        %v410 = vpop.f32.mrb[0].mxu0
        %411 = vdwg.mxu0
        %v413 = vsel %vm330, %v307, 0
        %v416 = vsel %vm330, %v308, 0
        %418 = vmatprep.subr.mxu0 0.0
        %419 = vmatpush1.msra.mxu0 %v313
        %420 = vmatprep.subr.mxu0 0.0
        %421 = vmatpush1.msra.mxu0 %v314
        %422 = vmatprep.subr.mxu0 0.0
        %423 = vmatpush1.msra.mxu0 %v315
        %424 = vmatprep.subr.mxu0 0.0
        %425 = vmatpush1.msra.mxu0 %v316
        %426 = vmatprep.subr.mxu0 0.0
        %427 = vmatpush1.msra.mxu0 %v317
        %428 = vmatprep.subr.mxu0 0.0
        %429 = vmatpush1.msra.mxu0 %v318
        %430 = vmatprep.subr.mxu0 0.0
        %431 = vmatpush1.msra.mxu0 %v319
        %432 = vmatprep.subr.mxu0 0.0
        %433 = vmatpush1.msra.mxu0 %v320
        %434 = vmatprep.subr.mxu0 0.0
        %435 = vmatpush1.msra.mxu0 0.0
        %436 = vmatprep.subr.mxu0 0.0
        %437 = vmatpush1.msra.mxu0 0.0
        %438 = vmatprep.subr.mxu0 0.0
        %439 = vmatpush1.msra.mxu0 0.0
        %440 = vmatprep.subr.mxu0 0.0
        %441 = vmatpush1.msra.mxu0 0.0
        %442 = vmatprep.subr.mxu0 0.0
        %443 = vmatpush1.msra.mxu0 0.0
        %444 = vmatprep.subr.mxu0 0.0
        %445 = vmatpush1.msra.mxu0 0.0
        %446 = vmatprep.subr.mxu0 0.0
        %447 = vmatpush1.msra.mxu0 0.0
        %448 = vmatprep.subr.mxu0 0.0
        %449 = vmatpush1.msra.mxu0 0.0
        %450 = vmatprep.subr.mxu0 0.0
        %451 = vmatpush1.msra.mxu0 0.0
        %452 = vmatprep.subr.mxu0 0.0
        %453 = vmatpush1.msra.mxu0 0.0
        %454 = vmatprep.subr.mxu0 0.0
        %455 = vmatpush1.msra.mxu0 0.0
        %456 = vmatprep.subr.mxu0 0.0
        %457 = vmatpush1.msra.mxu0 0.0
        %458 = vmatprep.subr.mxu0 0.0
        %459 = vmatpush1.msra.mxu0 0.0
        %460 = vmatprep.subr.mxu0 0.0
        %461 = vmatpush1.msra.mxu0 0.0
        %462 = vmatprep.subr.mxu0 0.0
        %463 = vmatpush1.msra.mxu0 0.0
        %464 = vmatprep.subr.mxu0 0.0
        %465 = vmatpush1.msra.mxu0 0.0
        %466 = vmatprep.subr.mxu0 0.0
        %467 = vmatpush1.msra.mxu0 0.0
        %468 = vmatprep.subr.mxu0 0.0
        %469 = vmatpush1.msra.mxu0 0.0
        %470 = vmatprep.subr.mxu0 0.0
        %471 = vmatpush1.msra.mxu0 0.0
        %472 = vmatprep.subr.mxu0 0.0
        %473 = vmatpush1.msra.mxu0 0.0
        %474 = vmatprep.subr.mxu0 0.0
        %475 = vmatpush1.msra.mxu0 0.0
        %476 = vmatprep.subr.mxu0 0.0
        %477 = vmatpush1.msra.mxu0 0.0
        %478 = vmatprep.subr.mxu0 0.0
        %479 = vmatpush1.msra.mxu0 0.0
        %480 = vmatprep.subr.mxu0 0.0
        %481 = vmatpush1.msra.mxu0 0.0
        %482 = vmatprep.mubr.f32.mxu0 0.0
        %483 = vmatmul.mubr.f32.gmra.mrb[0].mxu0 %v413
        %v484 = vpop.f32.mrb[0].mxu0
        %v485 = vadd.f32 %v404, %v484
        %v486 = vpop.f32.mrb[0].mxu0
        %487 = vmatprep.mubr.f32.mxu0 0.0
        %488 = vmatmul.mubr.f32.gmra.mrb[0].mxu0 %v416
        %v489 = vpop.f32.mrb[0].mxu0
        %v490 = vadd.f32 %v409, %v489
        %v491 = vpop.f32.mrb[0].mxu0
        %492 = vdwg.mxu0
        %s493 = scalar_lea.vmem [#allocation2], 128
        %v494 = vld [vmem:[%s493] sm:$0xff]
        %v495 = vld [vmem:[%s493 + $0x8] sm:$0xff]
        %v496 = vld [vmem:[%s493 + $0x10] sm:$0xff]
        %v497 = vld [vmem:[%s493 + $0x18] sm:$0xff]
        %v498 = vld [vmem:[%s493 + $0x20] sm:$0xff]
        %v499 = vld [vmem:[%s493 + $0x28] sm:$0xff]
        %v500 = vld [vmem:[%s493 + $0x30] sm:$0xff]
        %v501 = vld [vmem:[%s493 + $0x38] sm:$0xff]
        %v503 = vsel %vm330, %v311, 0
        %v506 = vsel %vm330, %v312, 0
        %508 = vmatprep.subr.mxu0 0.0
        %509 = vmatpush1.msra.mxu0 %v494
        %510 = vmatprep.subr.mxu0 0.0
        %511 = vmatpush1.msra.mxu0 %v495
        %512 = vmatprep.subr.mxu0 0.0
        %513 = vmatpush1.msra.mxu0 %v496
        %514 = vmatprep.subr.mxu0 0.0
        %515 = vmatpush1.msra.mxu0 %v497
        %516 = vmatprep.subr.mxu0 0.0
        %517 = vmatpush1.msra.mxu0 %v498
        %518 = vmatprep.subr.mxu0 0.0
        %519 = vmatpush1.msra.mxu0 %v499
        %520 = vmatprep.subr.mxu0 0.0
        %521 = vmatpush1.msra.mxu0 %v500
        %522 = vmatprep.subr.mxu0 0.0
        %523 = vmatpush1.msra.mxu0 %v501
        %524 = vmatprep.subr.mxu0 0.0
        %525 = vmatpush1.msra.mxu0 0.0
        %526 = vmatprep.subr.mxu0 0.0
        %527 = vmatpush1.msra.mxu0 0.0
        %528 = vmatprep.subr.mxu0 0.0
        %529 = vmatpush1.msra.mxu0 0.0
        %530 = vmatprep.subr.mxu0 0.0
        %531 = vmatpush1.msra.mxu0 0.0
        %532 = vmatprep.subr.mxu0 0.0
        %533 = vmatpush1.msra.mxu0 0.0
        %534 = vmatprep.subr.mxu0 0.0
        %535 = vmatpush1.msra.mxu0 0.0
        %536 = vmatprep.subr.mxu0 0.0
        %537 = vmatpush1.msra.mxu0 0.0
        %538 = vmatprep.subr.mxu0 0.0
        %539 = vmatpush1.msra.mxu0 0.0
        %540 = vmatprep.subr.mxu0 0.0
        %541 = vmatpush1.msra.mxu0 0.0
        %542 = vmatprep.subr.mxu0 0.0
        %543 = vmatpush1.msra.mxu0 0.0
        %544 = vmatprep.subr.mxu0 0.0
        %545 = vmatpush1.msra.mxu0 0.0
        %546 = vmatprep.subr.mxu0 0.0
        %547 = vmatpush1.msra.mxu0 0.0
        %548 = vmatprep.subr.mxu0 0.0
        %549 = vmatpush1.msra.mxu0 0.0
        %550 = vmatprep.subr.mxu0 0.0
        %551 = vmatpush1.msra.mxu0 0.0
        %552 = vmatprep.subr.mxu0 0.0
        %553 = vmatpush1.msra.mxu0 0.0
        %554 = vmatprep.subr.mxu0 0.0
        %555 = vmatpush1.msra.mxu0 0.0
        %556 = vmatprep.subr.mxu0 0.0
        %557 = vmatpush1.msra.mxu0 0.0
        %558 = vmatprep.subr.mxu0 0.0
        %559 = vmatpush1.msra.mxu0 0.0
        %560 = vmatprep.subr.mxu0 0.0
        %561 = vmatpush1.msra.mxu0 0.0
        %562 = vmatprep.subr.mxu0 0.0
        %563 = vmatpush1.msra.mxu0 0.0
        %564 = vmatprep.subr.mxu0 0.0
        %565 = vmatpush1.msra.mxu0 0.0
        %566 = vmatprep.subr.mxu0 0.0
        %567 = vmatpush1.msra.mxu0 0.0
        %568 = vmatprep.subr.mxu0 0.0
        %569 = vmatpush1.msra.mxu0 0.0
        %570 = vmatprep.subr.mxu0 0.0
        %571 = vmatpush1.msra.mxu0 0.0
        %572 = vmatprep.mubr.f32.mxu0 0.0
        %573 = vmatmul.mubr.f32.gmra.mrb[0].mxu0 %v503
        %v574 = vpop.f32.mrb[0].mxu0
        %v575 = vadd.f32 0.0, %v574
        %v576 = vpop.f32.mrb[0].mxu0
        %577 = vmatprep.mubr.f32.mxu0 0.0
        %578 = vmatmul.mubr.f32.gmra.mrb[0].mxu0 %v506
        %v579 = vpop.f32.mrb[0].mxu0
        %v580 = vadd.f32 0.0, %v579
        %v581 = vpop.f32.mrb[0].mxu0
        %582 = vdwg.mxu0
        %v583 = vadd.f32 %v485, %v575
        %v584 = vadd.f32 %v490, %v580
        %v585 = vld [vmem:[%s2] sm:$0x1]
        %v587 = vlaneseq
        %v588 = vshrl.u32 %v587, 7
        %v589 = vsub.s32 0, %v588
        %v590 = vrot.slane %v585, %v589
        %v592 = vadd.f32 %v583, %v590
        %v593 = vadd.f32 %v584, %v590
        %v594 = vmax.f32 %v592, 0.0
        %v595 = vmax.f32 %v593, 0.0
        %vm598 = vcmask 1040384
        %v599 = vrot.slane %v594, 7
        %v600 = vrot.slane %v595, 7
        %v601 = vsel %vm598, %v599, %v600
        %v605 = vsel %vm598, 0.0, %v599
        %v606 = vsel %vm598, %v600, 0.0
        %v607 = vld [vmem:[#allocation5] sm:$0xff]
        %v608 = vld [vmem:[#allocation5 + $0x8] sm:$0xff]
        %v609 = vld [vmem:[#allocation5 + $0x10] sm:$0xff]
        %v610 = vld [vmem:[#allocation5 + $0x18] sm:$0xff]
        %v611 = vld [vmem:[#allocation5 + $0x20] sm:$0xff]
        %v612 = vld [vmem:[#allocation5 + $0x28] sm:$0xff]
        %v613 = vld [vmem:[#allocation5 + $0x30] sm:$0xff]
        %v614 = vld [vmem:[#allocation5 + $0x38] sm:$0xff]
        %v615 = vld [vmem:[#allocation5 + $0x40] sm:$0xff]
        %v616 = vld [vmem:[#allocation5 + $0x48] sm:$0xff]
        %v617 = vld [vmem:[#allocation5 + $0x50] sm:$0xff]
        %v618 = vld [vmem:[#allocation5 + $0x58] sm:$0xff]
        %v619 = vld [vmem:[#allocation5 + $0x60] sm:$0xff]
        %v620 = vld [vmem:[#allocation5 + $0x68] sm:$0xff]
        %v621 = vld [vmem:[#allocation5 + $0x70] sm:$0xff]
        %v622 = vld [vmem:[#allocation5 + $0x78] sm:$0xff]
        %s623 = scalar_lea.vmem [#allocation5], 128
        %v624 = vld [vmem:[%s623] sm:$0xff]
        %v625 = vld [vmem:[%s623 + $0x8] sm:$0xff]
        %v626 = vld [vmem:[%s623 + $0x10] sm:$0xff]
        %v627 = vld [vmem:[%s623 + $0x18] sm:$0xff]
        %v628 = vld [vmem:[%s623 + $0x20] sm:$0xff]
        %v629 = vld [vmem:[%s623 + $0x28] sm:$0xff]
        %v630 = vld [vmem:[%s623 + $0x30] sm:$0xff]
        %v631 = vld [vmem:[%s623 + $0x38] sm:$0xff]
        %v632 = vld [vmem:[%s623 + $0x40] sm:$0xff]
        %v633 = vld [vmem:[%s623 + $0x48] sm:$0xff]
        %v634 = vld [vmem:[%s623 + $0x50] sm:$0xff]
        %v635 = vld [vmem:[%s623 + $0x58] sm:$0xff]
        %v636 = vld [vmem:[%s623 + $0x60] sm:$0xff]
        %v637 = vld [vmem:[%s623 + $0x68] sm:$0xff]
        %v638 = vld [vmem:[%s623 + $0x70] sm:$0xff]
        %v639 = vld [vmem:[%s623 + $0x78] sm:$0xff]
        %vm642 = vcmask 1046528
        %v643 = vrot.slane %v605, 1
        %v644 = vrot.slane %v601, 1
        %v645 = vsel %vm642, %v643, %v644
        %v646 = vrot.slane %v606, 1
        %v647 = vsel %vm642, %v644, %v646
        %650 = vmatprep.subr.mxu0 0.0
        %651 = vmatpush1.msra.mxu0 %v624
        %652 = vmatprep.subr.mxu0 0.0
        %653 = vmatpush1.msra.mxu0 %v625
        %654 = vmatprep.subr.mxu0 0.0
        %655 = vmatpush1.msra.mxu0 %v626
        %656 = vmatprep.subr.mxu0 0.0
        %657 = vmatpush1.msra.mxu0 %v627
        %658 = vmatprep.subr.mxu0 0.0
        %659 = vmatpush1.msra.mxu0 %v628
        %660 = vmatprep.subr.mxu0 0.0
        %661 = vmatpush1.msra.mxu0 %v629
        %662 = vmatprep.subr.mxu0 0.0
        %663 = vmatpush1.msra.mxu0 %v630
        %664 = vmatprep.subr.mxu0 0.0
        %665 = vmatpush1.msra.mxu0 %v631
        %666 = vmatprep.subr.mxu0 0.0
        %667 = vmatpush1.msra.mxu0 %v632
        %668 = vmatprep.subr.mxu0 0.0
        %669 = vmatpush1.msra.mxu0 %v633
        %670 = vmatprep.subr.mxu0 0.0
        %671 = vmatpush1.msra.mxu0 %v634
        %672 = vmatprep.subr.mxu0 0.0
        %673 = vmatpush1.msra.mxu0 %v635
        %674 = vmatprep.subr.mxu0 0.0
        %675 = vmatpush1.msra.mxu0 %v636
        %676 = vmatprep.subr.mxu0 0.0
        %677 = vmatpush1.msra.mxu0 %v637
        %678 = vmatprep.subr.mxu0 0.0
        %679 = vmatpush1.msra.mxu0 %v638
        %680 = vmatprep.subr.mxu0 0.0
        %681 = vmatpush1.msra.mxu0 %v639
        %682 = vmatprep.subr.mxu0 0.0
        %683 = vmatpush1.msra.mxu0 0.0
        %684 = vmatprep.subr.mxu0 0.0
        %685 = vmatpush1.msra.mxu0 0.0
        %686 = vmatprep.subr.mxu0 0.0
        %687 = vmatpush1.msra.mxu0 0.0
        %688 = vmatprep.subr.mxu0 0.0
        %689 = vmatpush1.msra.mxu0 0.0
        %690 = vmatprep.subr.mxu0 0.0
        %691 = vmatpush1.msra.mxu0 0.0
        %692 = vmatprep.subr.mxu0 0.0
        %693 = vmatpush1.msra.mxu0 0.0
        %694 = vmatprep.subr.mxu0 0.0
        %695 = vmatpush1.msra.mxu0 0.0
        %696 = vmatprep.subr.mxu0 0.0
        %697 = vmatpush1.msra.mxu0 0.0
        %698 = vmatprep.subr.mxu0 0.0
        %699 = vmatpush1.msra.mxu0 0.0
        %700 = vmatprep.subr.mxu0 0.0
        %701 = vmatpush1.msra.mxu0 0.0
        %702 = vmatprep.subr.mxu0 0.0
        %703 = vmatpush1.msra.mxu0 0.0
        %704 = vmatprep.subr.mxu0 0.0
        %705 = vmatpush1.msra.mxu0 0.0
        %706 = vmatprep.subr.mxu0 0.0
        %707 = vmatpush1.msra.mxu0 0.0
        %708 = vmatprep.subr.mxu0 0.0
        %709 = vmatpush1.msra.mxu0 0.0
        %710 = vmatprep.subr.mxu0 0.0
        %711 = vmatpush1.msra.mxu0 0.0
        %712 = vmatprep.subr.mxu0 0.0
        %713 = vmatpush1.msra.mxu0 0.0
        %714 = vmatprep.mubr.f32.mxu0 0.0
        %715 = vmatmul.mubr.f32.gmra.mrb[0].mxu0 %v645
        %v716 = vpop.f32.mrb[0].mxu0
        %v717 = vadd.f32 0.0, %v716
        %v718 = vpop.f32.mrb[0].mxu0
        %719 = vmatprep.mubr.f32.mxu0 0.0
        %720 = vmatmul.mubr.f32.gmra.mrb[0].mxu0 %v647
        %v721 = vpop.f32.mrb[0].mxu0
        %v722 = vadd.f32 0.0, %v721
        %v723 = vpop.f32.mrb[0].mxu0
        %724 = vdwg.mxu0
        %725 = vmatprep.subr.mxu0 0.0
        %726 = vmatpush1.msra.mxu0 %v607
        %727 = vmatprep.subr.mxu0 0.0
        %728 = vmatpush1.msra.mxu0 %v608
        %729 = vmatprep.subr.mxu0 0.0
        %730 = vmatpush1.msra.mxu0 %v609
        %731 = vmatprep.subr.mxu0 0.0
        %732 = vmatpush1.msra.mxu0 %v610
        %733 = vmatprep.subr.mxu0 0.0
        %734 = vmatpush1.msra.mxu0 %v611
        %735 = vmatprep.subr.mxu0 0.0
        %736 = vmatpush1.msra.mxu0 %v612
        %737 = vmatprep.subr.mxu0 0.0
        %738 = vmatpush1.msra.mxu0 %v613
        %739 = vmatprep.subr.mxu0 0.0
        %740 = vmatpush1.msra.mxu0 %v614
        %741 = vmatprep.subr.mxu0 0.0
        %742 = vmatpush1.msra.mxu0 %v615
        %743 = vmatprep.subr.mxu0 0.0
        %744 = vmatpush1.msra.mxu0 %v616
        %745 = vmatprep.subr.mxu0 0.0
        %746 = vmatpush1.msra.mxu0 %v617
        %747 = vmatprep.subr.mxu0 0.0
        %748 = vmatpush1.msra.mxu0 %v618
        %749 = vmatprep.subr.mxu0 0.0
        %750 = vmatpush1.msra.mxu0 %v619
        %751 = vmatprep.subr.mxu0 0.0
        %752 = vmatpush1.msra.mxu0 %v620
        %753 = vmatprep.subr.mxu0 0.0
        %754 = vmatpush1.msra.mxu0 %v621
        %755 = vmatprep.subr.mxu0 0.0
        %756 = vmatpush1.msra.mxu0 %v622
        %757 = vmatprep.subr.mxu0 0.0
        %758 = vmatpush1.msra.mxu0 0.0
        %759 = vmatprep.subr.mxu0 0.0
        %760 = vmatpush1.msra.mxu0 0.0
        %761 = vmatprep.subr.mxu0 0.0
        %762 = vmatpush1.msra.mxu0 0.0
        %763 = vmatprep.subr.mxu0 0.0
        %764 = vmatpush1.msra.mxu0 0.0
        %765 = vmatprep.subr.mxu0 0.0
        %766 = vmatpush1.msra.mxu0 0.0
        %767 = vmatprep.subr.mxu0 0.0
        %768 = vmatpush1.msra.mxu0 0.0
        %769 = vmatprep.subr.mxu0 0.0
        %770 = vmatpush1.msra.mxu0 0.0
        %771 = vmatprep.subr.mxu0 0.0
        %772 = vmatpush1.msra.mxu0 0.0
        %773 = vmatprep.subr.mxu0 0.0
        %774 = vmatpush1.msra.mxu0 0.0
        %775 = vmatprep.subr.mxu0 0.0
        %776 = vmatpush1.msra.mxu0 0.0
        %777 = vmatprep.subr.mxu0 0.0
        %778 = vmatpush1.msra.mxu0 0.0
        %779 = vmatprep.subr.mxu0 0.0
        %780 = vmatpush1.msra.mxu0 0.0
        %781 = vmatprep.subr.mxu0 0.0
        %782 = vmatpush1.msra.mxu0 0.0
        %783 = vmatprep.subr.mxu0 0.0
        %784 = vmatpush1.msra.mxu0 0.0
        %785 = vmatprep.subr.mxu0 0.0
        %786 = vmatpush1.msra.mxu0 0.0
        %787 = vmatprep.subr.mxu0 0.0
        %788 = vmatpush1.msra.mxu0 0.0
        %789 = vmatprep.mubr.f32.mxu0 0.0
        %790 = vmatmul.mubr.f32.gmra.mrb[0].mxu0 %v605
        %v791 = vpop.f32.mrb[0].mxu0
        %v792 = vadd.f32 %v717, %v791
        %v793 = vpop.f32.mrb[0].mxu0
        %794 = vmatprep.mubr.f32.mxu0 0.0
        %795 = vmatmul.mubr.f32.gmra.mrb[0].mxu0 %v601
        %v796 = vpop.f32.mrb[0].mxu0
        %v797 = vadd.f32 %v722, %v796
        %v798 = vpop.f32.mrb[0].mxu0
        %799 = vdwg.mxu0
        %s800 = scalar_lea.vmem [#allocation5], 256
        %v801 = vld [vmem:[%s800] sm:$0xff]
        %v802 = vld [vmem:[%s800 + $0x8] sm:$0xff]
        %v803 = vld [vmem:[%s800 + $0x10] sm:$0xff]
        %v804 = vld [vmem:[%s800 + $0x18] sm:$0xff]
        %v805 = vld [vmem:[%s800 + $0x20] sm:$0xff]
        %v806 = vld [vmem:[%s800 + $0x28] sm:$0xff]
        %v807 = vld [vmem:[%s800 + $0x30] sm:$0xff]
        %v808 = vld [vmem:[%s800 + $0x38] sm:$0xff]
        %v809 = vld [vmem:[%s800 + $0x40] sm:$0xff]
        %v810 = vld [vmem:[%s800 + $0x48] sm:$0xff]
        %v811 = vld [vmem:[%s800 + $0x50] sm:$0xff]
        %v812 = vld [vmem:[%s800 + $0x58] sm:$0xff]
        %v813 = vld [vmem:[%s800 + $0x60] sm:$0xff]
        %v814 = vld [vmem:[%s800 + $0x68] sm:$0xff]
        %v815 = vld [vmem:[%s800 + $0x70] sm:$0xff]
        %v816 = vld [vmem:[%s800 + $0x78] sm:$0xff]
        %vm817 = vcmask 1045504
        %v818 = vrot.slane %v605, 2
        %v819 = vrot.slane %v601, 2
        %v820 = vsel %vm817, %v818, %v819
        %v821 = vrot.slane %v606, 2
        %v822 = vsel %vm817, %v819, %v821
        %825 = vmatprep.subr.mxu0 0.0
        %826 = vmatpush1.msra.mxu0 %v801
        %827 = vmatprep.subr.mxu0 0.0
        %828 = vmatpush1.msra.mxu0 %v802
        %829 = vmatprep.subr.mxu0 0.0
        %830 = vmatpush1.msra.mxu0 %v803
        %831 = vmatprep.subr.mxu0 0.0
        %832 = vmatpush1.msra.mxu0 %v804
        %833 = vmatprep.subr.mxu0 0.0
        %834 = vmatpush1.msra.mxu0 %v805
        %835 = vmatprep.subr.mxu0 0.0
        %836 = vmatpush1.msra.mxu0 %v806
        %837 = vmatprep.subr.mxu0 0.0
        %838 = vmatpush1.msra.mxu0 %v807
        %839 = vmatprep.subr.mxu0 0.0
        %840 = vmatpush1.msra.mxu0 %v808
        %841 = vmatprep.subr.mxu0 0.0
        %842 = vmatpush1.msra.mxu0 %v809
        %843 = vmatprep.subr.mxu0 0.0
        %844 = vmatpush1.msra.mxu0 %v810
        %845 = vmatprep.subr.mxu0 0.0
        %846 = vmatpush1.msra.mxu0 %v811
        %847 = vmatprep.subr.mxu0 0.0
        %848 = vmatpush1.msra.mxu0 %v812
        %849 = vmatprep.subr.mxu0 0.0
        %850 = vmatpush1.msra.mxu0 %v813
        %851 = vmatprep.subr.mxu0 0.0
        %852 = vmatpush1.msra.mxu0 %v814
        %853 = vmatprep.subr.mxu0 0.0
        %854 = vmatpush1.msra.mxu0 %v815
        %855 = vmatprep.subr.mxu0 0.0
        %856 = vmatpush1.msra.mxu0 %v816
        %857 = vmatprep.subr.mxu0 0.0
        %858 = vmatpush1.msra.mxu0 0.0
        %859 = vmatprep.subr.mxu0 0.0
        %860 = vmatpush1.msra.mxu0 0.0
        %861 = vmatprep.subr.mxu0 0.0
        %862 = vmatpush1.msra.mxu0 0.0
        %863 = vmatprep.subr.mxu0 0.0
        %864 = vmatpush1.msra.mxu0 0.0
        %865 = vmatprep.subr.mxu0 0.0
        %866 = vmatpush1.msra.mxu0 0.0
        %867 = vmatprep.subr.mxu0 0.0
        %868 = vmatpush1.msra.mxu0 0.0
        %869 = vmatprep.subr.mxu0 0.0
        %870 = vmatpush1.msra.mxu0 0.0
        %871 = vmatprep.subr.mxu0 0.0
        %872 = vmatpush1.msra.mxu0 0.0
        %873 = vmatprep.subr.mxu0 0.0
        %874 = vmatpush1.msra.mxu0 0.0
        %875 = vmatprep.subr.mxu0 0.0
        %876 = vmatpush1.msra.mxu0 0.0
        %877 = vmatprep.subr.mxu0 0.0
        %878 = vmatpush1.msra.mxu0 0.0
        %879 = vmatprep.subr.mxu0 0.0
        %880 = vmatpush1.msra.mxu0 0.0
        %881 = vmatprep.subr.mxu0 0.0
        %882 = vmatpush1.msra.mxu0 0.0
        %883 = vmatprep.subr.mxu0 0.0
        %884 = vmatpush1.msra.mxu0 0.0
        %885 = vmatprep.subr.mxu0 0.0
        %886 = vmatpush1.msra.mxu0 0.0
        %887 = vmatprep.subr.mxu0 0.0
        %888 = vmatpush1.msra.mxu0 0.0
        %889 = vmatprep.mubr.f32.mxu0 0.0
        %890 = vmatmul.mubr.f32.gmra.mrb[0].mxu0 %v820
        %v891 = vpop.f32.mrb[0].mxu0
        %v892 = vadd.f32 0.0, %v891
        %v893 = vpop.f32.mrb[0].mxu0
        %894 = vmatprep.mubr.f32.mxu0 0.0
        %895 = vmatmul.mubr.f32.gmra.mrb[0].mxu0 %v822
        %v896 = vpop.f32.mrb[0].mxu0
        %v897 = vadd.f32 0.0, %v896
        %v898 = vpop.f32.mrb[0].mxu0
        %899 = vdwg.mxu0
        %v900 = vadd.f32 %v792, %v892
        %v901 = vadd.f32 %v797, %v897
        %v902 = vld [vmem:[%s4] sm:$0x1]
        %v904 = vlaneseq
        %v905 = vshrl.u32 %v904, 7
        %v906 = vsub.s32 0, %v905
        %v907 = vrot.slane %v902, %v906
        %v909 = vadd.f32 %v900, %v907
        %v910 = vadd.f32 %v901, %v907
        %v911 = vld [vmem:[%s5] sm:$0xff]
        %v912 = vld [vmem:[%s5 + $0x8] sm:$0xff]
        %v913 = vld [vmem:[%s5 + $0x10] sm:$0xff]
        %v914 = vld [vmem:[%s5 + $0x18] sm:$0xff]
        %v915 = vld [vmem:[%s5 + $0x20] sm:$0xff]
        %v916 = vld [vmem:[%s5 + $0x28] sm:$0xff]
        %v917 = vld [vmem:[%s5 + $0x30] sm:$0xff]
        %v918 = vld [vmem:[%s5 + $0x38] sm:$0xff]
        %v919 = vld [vmem:[%s6] sm:$0x1]
        %v921 = vlaneseq
        %v922 = vshrl.u32 %v921, 7
        %v923 = vsub.s32 0, %v922
        %v924 = vrot.slane %v919, %v923
        %926 = vmatprep.subr.mxu0 0.0
        %927 = vmatpush1.msra.mxu0 %v911
        %928 = vmatprep.subr.mxu0 0.0
        %929 = vmatpush1.msra.mxu0 %v912
        %930 = vmatprep.subr.mxu0 0.0
        %931 = vmatpush1.msra.mxu0 %v913
        %932 = vmatprep.subr.mxu0 0.0
        %933 = vmatpush1.msra.mxu0 %v914
        %934 = vmatprep.subr.mxu0 0.0
        %935 = vmatpush1.msra.mxu0 %v915
        %936 = vmatprep.subr.mxu0 0.0
        %937 = vmatpush1.msra.mxu0 %v916
        %938 = vmatprep.subr.mxu0 0.0
        %939 = vmatpush1.msra.mxu0 %v917
        %940 = vmatprep.subr.mxu0 0.0
        %941 = vmatpush1.msra.mxu0 %v918
        %942 = vmatprep.subr.mxu0 0.0
        %943 = vmatpush1.msra.mxu0 0.0
        %944 = vmatprep.subr.mxu0 0.0
        %945 = vmatpush1.msra.mxu0 0.0
        %946 = vmatprep.subr.mxu0 0.0
        %947 = vmatpush1.msra.mxu0 0.0
        %948 = vmatprep.subr.mxu0 0.0
        %949 = vmatpush1.msra.mxu0 0.0
        %950 = vmatprep.subr.mxu0 0.0
        %951 = vmatpush1.msra.mxu0 0.0
        %952 = vmatprep.subr.mxu0 0.0
        %953 = vmatpush1.msra.mxu0 0.0
        %954 = vmatprep.subr.mxu0 0.0
        %955 = vmatpush1.msra.mxu0 0.0
        %956 = vmatprep.subr.mxu0 0.0
        %957 = vmatpush1.msra.mxu0 0.0
        %958 = vmatprep.subr.mxu0 0.0
        %959 = vmatpush1.msra.mxu0 0.0
        %960 = vmatprep.subr.mxu0 0.0
        %961 = vmatpush1.msra.mxu0 0.0
        %962 = vmatprep.subr.mxu0 0.0
        %963 = vmatpush1.msra.mxu0 0.0
        %964 = vmatprep.subr.mxu0 0.0
        %965 = vmatpush1.msra.mxu0 0.0
        %966 = vmatprep.subr.mxu0 0.0
        %967 = vmatpush1.msra.mxu0 0.0
        %968 = vmatprep.subr.mxu0 0.0
        %969 = vmatpush1.msra.mxu0 0.0
        %970 = vmatprep.subr.mxu0 0.0
        %971 = vmatpush1.msra.mxu0 0.0
        %972 = vmatprep.subr.mxu0 0.0
        %973 = vmatpush1.msra.mxu0 0.0
        %974 = vmatprep.subr.mxu0 0.0
        %975 = vmatpush1.msra.mxu0 0.0
        %976 = vmatprep.subr.mxu0 0.0
        %977 = vmatpush1.msra.mxu0 0.0
        %978 = vmatprep.subr.mxu0 0.0
        %979 = vmatpush1.msra.mxu0 0.0
        %980 = vmatprep.subr.mxu0 0.0
        %981 = vmatpush1.msra.mxu0 0.0
        %982 = vmatprep.subr.mxu0 0.0
        %983 = vmatpush1.msra.mxu0 0.0
        %984 = vmatprep.subr.mxu0 0.0
        %985 = vmatpush1.msra.mxu0 0.0
        %986 = vmatprep.subr.mxu0 0.0
        %987 = vmatpush1.msra.mxu0 0.0
        %988 = vmatprep.subr.mxu0 0.0
        %989 = vmatpush1.msra.mxu0 0.0
        %990 = vmatprep.mubr.f32.mxu0 0.0
        %991 = vmatmul.mubr.f32.gmra.mrb[0].mxu0 %v332
        %v992 = vpop.f32.mrb[0].mxu0
        %v993 = vadd.f32 %v924, %v992
        %v994 = vpop.f32.mrb[0].mxu0
        %995 = vmatprep.mubr.f32.mxu0 0.0
        %996 = vmatmul.mubr.f32.gmra.mrb[0].mxu0 %v335
        %v997 = vpop.f32.mrb[0].mxu0
        %v998 = vadd.f32 %v924, %v997
        %v999 = vpop.f32.mrb[0].mxu0
        %1000 = vdwg.mxu0
        %v1001 = vadd.f32 %v909, %v993
        %v1002 = vadd.f32 %v910, %v998
        %v1003 = vmax.f32 %v1001, 0.0
        %v1004 = vmax.f32 %v1002, 0.0
        %1005 = vst [vmem:[%s301] sm:$0xff] %v1003
        %1006 = vst [vmem:[%s301 + $0x8] sm:$0xff] %v1004
        %s1007 = sand.u32 %s183, 1
        %s1008 = scalar_lea.sflag [#allocation4], %s1007
        %s1009 = sand.u32 %s183, 1
        %s1010 = smul.addr %s1009, 16
        %s1011 = scalar_lea.vmem [#allocation7], %s1010
        // Predicated region
        $region57: #{tpu_custom_call.1} parent=47 // pred_check
          %p1012 = pneg %p193
        $region58: #{tpu_custom_call.1} parent=47 // pred_check_branch
          %1014 = sbr.rel (%p1012) target = $region60
        $region59: #{tpu_custom_call.1} parent=47 // pred_region
          %s1016 = ssub.s32 256, 256
          %1017 = vsyncadd %s1008, %s1016
          %s1018 = smul.addr %s23, 2
          %s1019 = smul.addr %s1018, 128
          %s1020 = scalar_lea.hbm %s7, %s1019
          %s1021 = sshll.u32 %s1011, 4
          %s1022 = int_to_ptr.vmem [resolvable:$true] %s1021
          %1027 = dma.vmem_to_hbm [thread:$0]  %s1022, 256, %s1020, %s1008, 128, 128, 8
        $region60: #{tpu_custom_call.1} parent=47 // pred_fallthru
          _
      $region48: #{tpu_custom_call.1} parent=5 // pred_fallthru
        _
      %p1028 = scmp.le.s32.totalorder 2, %s18
      // Predicated region
      $region61: #{tpu_custom_call.1} parent=5 // pred_check
        %p1029 = pneg %p1028
      $region62: #{tpu_custom_call.1} parent=5 // pred_check_branch
        %1031 = sbr.rel (%p1029) target = $region64
      $region63: #{tpu_custom_call.1} parent=5 // pred_region
        %s1032 = ssub.s32 %s18, 2
        // Predicated region
        $region65: #{tpu_custom_call.1} parent=63 // pred_check
          %p1033 = pneg %p199
        $region66: #{tpu_custom_call.1} parent=63 // pred_check_branch
          %1035 = sbr.rel (%p1033) target = $region68
        $region67: #{tpu_custom_call.1} parent=63 // pred_region
          %s1036 = sand.u32 %s184, 1
          %s1037 = scalar_lea.sflag [#allocation4], %s1036
          %s1038 = sand.u32 %s184, 1
          %s1039 = smul.addr %s1038, 16
          %s1040 = scalar_lea.vmem [#allocation7], %s1039
          %1041 = dma.done %s1037, 256
        $region68: #{tpu_custom_call.1} parent=63 // pred_fallthru
          _
      $region64: #{tpu_custom_call.1} parent=5 // pred_fallthru
        _
    $region6: #{tpu_custom_call.1} parent=1 // loop_footer
      %s22 = sadd.s32 1, %s18
    $region7: #{tpu_custom_call.1} parent=1 // loop_footer_branch
      %17 = sbr.rel target = $region3
    $region8: #{tpu_custom_call.1} parent=1 // loop_exit
      _
    %1042 = vsyncpa [#allocation3], 1
    %s1043 = scalar_lea.sflag [#allocation3], 1
    %1044 = vsyncpa %s1043, 1
    %1045 = vsyncpa [#allocation6], 1
    %1046 = vsyncpa [#allocation4], 1
    %s1047 = scalar_lea.sflag [#allocation4], 1
    %1048 = vsyncpa %s1047, 1

</llo_original>
